<compile_context>
chip_gen: v7x
topology: tpu7x:2x2x1
jax: 0.10.0
libtpu: 0.0.40
codegen_flags: <defaults>
</compile_context>

<pallas_src>
import functools
import math

import jax
import jax.numpy as jnp
from jax import lax
from jax.experimental import pallas as pl
from jax.experimental.pallas import tpu as pltpu


def _pair(v):
    return tuple(v) if isinstance(v, (tuple, list)) else (v, v)


def _round_up(x, m):
    return (x + m - 1) // m * m


# ---------------------------------------------------------------------------
# Shared helper: tap slice of the resident flattened activation.
# The dynamic base (grid tile start + 128-aligned part of the tap offset) is a
# multiple of 128; the sub-128 remainder is a static in-vreg lane shift.
# ---------------------------------------------------------------------------
def _tap_slice(x_ref, start, off, tm):
    off_hi = (off // 128) * 128
    off_lo = off - off_hi
    base = pl.multiple_of(start + off_hi, 128)
    if off_lo == 0:
        return x_ref[0, :, pl.ds(base, tm)]
    v = x_ref[0, :, pl.ds(base, tm + 128)]
    return v[:, off_lo:off_lo + tm]


def _epilogue(r, b_ref, o_ref, act, slope):
    r = r + b_ref[...]
    if act == "lrelu":
        r = jnp.where(r > 0, r, slope * r)
    elif act == "relu":
        r = jnp.maximum(r, 0.0)
    o_ref[0] = r.astype(o_ref.dtype)


# ---------------------------------------------------------------------------
# Folded-K kernel (small Cin): in-VMEM im2col + one MXU matmul per tile.
#   x_ref  : (1, Cin_k, Mflat_p)  bf16   resident flattened padded image
#   w_ref  : (tco, K=T*Cin_k)     bf16   tap-stacked weights of this cout tile
#   b_ref  : (tco, 1)             f32
#   o_ref  : (1, tco, tm)         bf16
#   rhs_ref: (K, tm)              bf16   in-VMEM im2col scratch
# ---------------------------------------------------------------------------
def _conv_folded_kernel(x_ref, w_ref, b_ref, o_ref, rhs_ref, *,
                        tap_offsets, cin, tm, act, slope):
    i = pl.program_id(2)
    start = pl.multiple_of(i * tm, 128)          # tm is always a mult of 128
    for t, off in enumerate(tap_offsets):        # in-VMEM im2col (no HBM copy)
        rhs_ref[pl.ds(t * cin, cin), :] = _tap_slice(x_ref, start, off, tm)
    r = jnp.dot(w_ref[...], rhs_ref[...], preferred_element_type=jnp.float32)
    _epilogue(r, b_ref, o_ref, act, slope)


# ---------------------------------------------------------------------------
# Per-tap kernel (large Cin or 1x1): K=Cin dots, vreg-resident f32 accumulator.
#   x_ref : (1, Cin, Mflat_p)  bf16
#   w_ref : (T, tco, Cin)      bf16
#   b_ref : (tco, 1)           f32
#   o_ref : (1, tco, tm)       bf16
# ---------------------------------------------------------------------------
def _conv_pertap_kernel(x_ref, w_ref, b_ref, o_ref, *,
                        tap_offsets, tm, act, slope):
    i = pl.program_id(2)
    start = pl.multiple_of(i * tm, 128)
    acc = None
    for t, off in enumerate(tap_offsets):
        rhs = _tap_slice(x_ref, start, off, tm)                 # (Cin, tm)
        d = jnp.dot(w_ref[t], rhs, preferred_element_type=jnp.float32)
        acc = d if acc is None else acc + d
    _epilogue(acc, b_ref, o_ref, act, slope)


# ---------------------------------------------------------------------------
# One-time weight packing (hoisted out of the per-call path).
# ---------------------------------------------------------------------------
def pack_conv2d_params(w, b=None, bn=None, fold_k_threshold=512):
    """w: (Cout, Cin, kh, kw) f32 (PyTorch layout); b: (Cout,) or None;
    bn: None or dict(gamma, beta, mean, var, eps) folded in eval mode."""
    Cout, Cin, kh, kw = w.shape
    w = w.astype(jnp.float32)
    bias = jnp.zeros((Cout,), jnp.float32) if b is None else b.astype(jnp.float32)
    if bn is not None:
        scale = bn["gamma"] / jnp.sqrt(bn["var"] + bn["eps"])
        w = w * scale[:, None, None, None]
        bias = bn["beta"] + (bias - bn["mean"]) * scale

    T = kh * kw
    tco = min(_round_up(Cout, 8), 128)           # keep tco*tm vreg-friendly
    Cop = _round_up(Cout, tco)
    folded = (T > 1) and (Cin * T <= fold_k_threshold)

    if folded:
        cin_k = _round_up(Cin, 8)                # aligned tap blocks in scratch
        w4 = jnp.transpose(w, (0, 2, 3, 1))      # (Cout, kh, kw, Cin)
        w4 = jnp.pad(w4, ((0, Cop - Cout), (0, 0), (0, 0), (0, cin_k - Cin)))
        wp = w4.reshape(Cop, T * cin_k).astype(jnp.bfloat16)
    else:
        cin_k = Cin
        wt = jnp.transpose(w, (2, 3, 0, 1)).reshape(T, Cout, Cin)
        wp = jnp.pad(wt, ((0, 0), (0, Cop - Cout), (0, 0))).astype(jnp.bfloat16)

    bp = jnp.pad(bias, (0, Cop - Cout)).reshape(Cop, 1).astype(jnp.float32)
    return dict(w=wp, b=bp, kh=kh, kw=kw, cin=Cin, cin_k=cin_k, cout=Cout,
                cop=Cop, tco=tco, folded=folded)


# ---------------------------------------------------------------------------
# Conv2d forward (NCHW), stride-1 fused path; stride>1 handled by subsampling.
# ---------------------------------------------------------------------------
def conv2d_pallas(x, params, stride=1, padding=0, act="none", slope=0.1):
    N, Cin, H, W = x.shape
    assert Cin == params["cin"]
    kh, kw = params["kh"], params["kw"]
    T = kh * kw
    sh, sw = _pair(stride)
    ph, pw = _pair(padding)
    Hp, Wp = H + 2 * ph, W + 2 * pw
    Ho1, Wo1 = Hp - kh + 1, Wp - kw + 1          # stride-1 output extent
    assert Ho1 >= 1 and Wo1 >= 1

    cin_k = params["cin_k"]
    Cop, tco = params["cop"], params["tco"]
    folded = params["folded"]

    # Tile sizes: tm a multiple of 128 (lane-dense stores), tco*tm <= 32K f32.
    M_full = Ho1 * Wp                            # full-width rows; crop later
    tm_cap = min(512, max(128, (32768 // tco) // 128 * 128))
    tm = min(_round_up(M_full, 128), tm_cap)
    Mp = _round_up(M_full, tm)

    max_off = (kh - 1) * Wp + (kw - 1)
    pad_tail = 0 if max_off == 0 else _round_up(max_off, 128) + 128
    Mflat_p = _round_up(max(Mp + pad_tail, Hp * Wp), 128)

    # Spatial zero-pad (+ channel pad for the folded path), flatten H*W onto
    # the lane axis: NCHW end-to-end, no transposes.
    xp = x
    if ph or pw or cin_k != Cin:
        xp = jnp.pad(xp, ((0, 0), (0, cin_k - Cin), (ph, ph), (pw, pw)))
    xf = xp.reshape(N, cin_k, Hp * Wp).astype(jnp.bfloat16)
    if Mflat_p != Hp * Wp:
        xf = jnp.pad(xf, ((0, 0), (0, 0), (0, Mflat_p - Hp * Wp)))

    J, I = Cop // tco, Mp // tm
    tap_offsets = tuple(a * Wp + b for a in range(kh) for b in range(kw))
    K = T * cin_k

    # --- VMEM budget (generation aware) ------------------------------------
    def s16(v):                                   # bf16 sublane padding
        return _round_up(v, 16)
    x_blk = 2 * s16(cin_k) * Mflat_p * 2          # activation (double-buffered)
    if folded:
        w_blk = 2 * s16(tco) * _round_up(K, 128) * 2
        scratch = s16(K) * tm * 2
    else:
        w_blk = 2 * T * s16(tco) * _round_up(Cin, 128) * 2
        scratch = 0
    b_blk = 2 * _round_up(tco, 8) * 128 * 4
    o_blk = 2 * s16(tco) * tm * 2
    live = _round_up(tco, 8) * tm * 4             # f32 result in flight
    need = x_blk + w_blk + b_blk + o_blk + scratch + live
    try:
        cap = int(getattr(pltpu.get_tpu_info(), "vmem_capacity_bytes", 64 << 20))
    except Exception:
        cap = 64 << 20                            # conservative (v7x) fallback
    budget = int(cap * 0.85)
    if need > budget:
        # TODO(synk): windowed (per-M-tile) activation fallback for feature
        # maps too large to keep VMEM-resident (matters on v7x's 64 MiB VMEM);
        # not needed for VFIT-S feature-map sizes.
        raise ValueError(f"resident-activation conv needs {need} B VMEM, "
                         f"budget is {budget} B")
    vmem_limit = int(min(max(need + (8 << 20), 32 << 20), budget))

    if folded:
        kernel = functools.partial(_conv_folded_kernel, tap_offsets=tap_offsets,
                                   cin=cin_k, tm=tm, act=act, slope=slope)
        w_spec = pl.BlockSpec((tco, K), lambda n, j, i: (j, 0))
        scratch_shapes = [pltpu.VMEM((K, tm), jnp.bfloat16)]
    else:
        kernel = functools.partial(_conv_pertap_kernel, tap_offsets=tap_offsets,
                                   tm=tm, act=act, slope=slope)
        w_spec = pl.BlockSpec((T, tco, Cin), lambda n, j, i: (0, j, 0))
        scratch_shapes = []

    # Megacore: split on the batch axis when possible so each TensorCore only
    # DMAs its own batch elements' activations (relevant on 2-TC chips).
    if N >= 2:
        dims = ("parallel", "arbitrary", "arbitrary")
    else:
        dims = ("parallel", "parallel", "parallel")

    # TODO(synk): for tiny feature maps (grid degenerates to (N,1,1)) block
    # several batch elements per grid step to amortize per-step overhead.
    out_full = pl.pallas_call(
        kernel,
        out_shape=jax.ShapeDtypeStruct((N, Cop, Mp), jnp.bfloat16),
        grid_spec=pltpu.PrefetchScalarGridSpec(
            num_scalar_prefetch=0,
            grid=(N, J, I),
            in_specs=[
                # whole flattened image for batch n: resident across (j, i)
                pl.BlockSpec((1, cin_k, Mflat_p), lambda n, j, i: (n, 0, 0)),
                # all taps of cout tile j: resident across i
                w_spec,
                pl.BlockSpec((tco, 1), lambda n, j, i: (j, 0)),
            ],
            out_specs=pl.BlockSpec((1, tco, tm), lambda n, j, i: (n, j, i)),
            scratch_shapes=scratch_shapes,
        ),
        compiler_params=pltpu.CompilerParams(
            dimension_semantics=dims, vmem_limit_bytes=vmem_limit),
    )(xf, params["w"], params["b"])

    Cout = params["cout"]
    out = out_full[:, :Cout, :M_full].reshape(N, Cout, Ho1, Wp)[:, :, :, :Wo1]
    if sh != 1 or sw != 1:
        # TODO(synk): strided Conv_2d is not used in VFIT-S; computed as the
        # stride-1 conv subsampled (exactly correct, not compute-optimal).
        out = out[:, :, ::sh, ::sw]
    return out                                    # bf16 (lane-dense writeback)


# ---------------------------------------------------------------------------
# Module analogue of VFIT-S `Conv_2d` (Conv2d [+ BatchNorm2d], inference).
# ---------------------------------------------------------------------------
class Conv2d:
    def __init__(self, in_ch, out_ch, kernel_size, stride=1, padding=0,
                 bias=False, batchnorm=False, *, key):
        kh, kw = _pair(kernel_size)
        fan_in = in_ch * kh * kw
        bound = 1.0 / math.sqrt(fan_in)
        k_w, k_b = jax.random.split(key)
        w = jax.random.uniform(k_w, (out_ch, in_ch, kh, kw), jnp.float32,
                               -bound, bound)
        b = (jax.random.uniform(k_b, (out_ch,), jnp.float32, -bound, bound)
             if bias else None)
        bn = None
        if batchnorm:
            # TODO(synk): BatchNorm folded in eval mode (running stats);
            # train-mode batch statistics are not implemented.
            bn = dict(gamma=jnp.ones((out_ch,), jnp.float32),
                      beta=jnp.zeros((out_ch,), jnp.float32),
                      mean=jnp.zeros((out_ch,), jnp.float32),
                      var=jnp.ones((out_ch,), jnp.float32),
                      eps=1e-5)
        self.w_f32, self.b_f32, self.bn = w, b, bn
        self.stride, self.padding = stride, padding
        self.packed = pack_conv2d_params(w, b, bn)   # hoisted, packed once

    def __call__(self, x):
        return conv2d_pallas(x, self.packed, self.stride, self.padding)


def conv2d_reference(x, conv):
    """f32 reference (lax.conv, HIGHEST precision) on bf16-rounded operands."""
    w = conv.w_f32
    b = conv.b_f32
    if conv.bn is not None:
        s = conv.bn["gamma"] / jnp.sqrt(conv.bn["var"] + conv.bn["eps"])
        w = w * s[:, None, None, None]
        b0 = jnp.zeros((w.shape[0],), jnp.float32) if b is None else b
        b = conv.bn["beta"] + (b0 - conv.bn["mean"]) * s
    w = w.astype(jnp.bfloat16).astype(jnp.float32)
    xb = x.astype(jnp.bfloat16).astype(jnp.float32)
    sh, sw = _pair(conv.stride)
    ph, pw = _pair(conv.padding)
    y = lax.conv_general_dilated(
        xb, w, window_strides=(sh, sw), padding=((ph, ph), (pw, pw)),
        dimension_numbers=("NCHW", "OIHW", "NCHW"),
        precision=lax.Precision.HIGHEST)
    if b is not None:
        y = y + b[None, :, None, None]
    return y


# ---------------------------------------------------------------------------
if __name__ == "__main__":
    key = jax.random.PRNGKey(0)
    kx, kx2, k1, k2, k3, k4, k5 = jax.random.split(key, 7)

    x = jax.random.normal(kx, (2, 4, 16, 16), jnp.float32)       # small NCHW
    x_wide = jax.random.normal(kx2, (2, 64, 16, 16), jnp.float32)

    tests = [
        ("3x3 s1 p1 nobias (folded-K)", x,
         Conv2d(4, 32, 3, stride=1, padding=1, key=k1)),
        ("1x1 s1 p0 nobias (per-tap)", x,
         Conv2d(4, 8, 1, stride=1, padding=0, key=k2)),
        ("3x3 s1 p1 bias+bn (folded-K)", x,
         Conv2d(4, 25, 3, stride=1, padding=1, bias=True, batchnorm=True,
                key=k3)),
        ("3x3 s2 p1 bias (folded-K)", x,
         Conv2d(4, 8, 3, stride=2, padding=1, bias=True, key=k4)),
        ("3x3 s1 p1 bias wide-Cin (per-tap)", x_wide,
         Conv2d(64, 32, 3, stride=1, padding=1, bias=True, key=k5)),
    ]

    for name, xin, conv in tests:
        out = jax.block_until_ready(conv(xin))
        ref = jax.block_until_ready(conv2d_reference(xin, conv))
        assert out.shape == ref.shape, (name, out.shape, ref.shape)
        outf = out.astype(jnp.float32)
        assert bool(jnp.all(jnp.isfinite(outf))), name
        err = float(jnp.max(jnp.abs(outf - ref)))
        tol = 6e-3 * (1.0 + float(jnp.max(jnp.abs(ref))))
        assert err <= tol, (name, err, tol)

    print("KERNEL_OK")
</pallas_src>

<mosaic_0001>
module attributes {stable_mosaic.version = 11 : i64} {
  func.func @_conv_folded_kernel(%arg0: i32, %arg1: i32, %arg2: i32, %arg3: memref<1x8x640xbf16, #tpu.memory_space<vmem>>, %arg4: memref<32x72xbf16, #tpu.memory_space<vmem>>, %arg5: memref<32x1xf32, #tpu.memory_space<vmem>>, %arg6: memref<1x32x384xbf16, #tpu.memory_space<vmem>>, %arg7: memref<72x384xbf16, #tpu.memory_space<vmem>>) attributes {dimension_semantics = [#tpu.dimension_semantics<parallel>, #tpu.dimension_semantics<arbitrary>, #tpu.dimension_semantics<arbitrary>], iteration_bounds = array<i64: 2, 1, 1>, scalar_prefetch = 0 : i64, scratch_operands = 1 : i64, tpu.core_type = #tpu.core_type<tc>, window_params = [{transform_indices = @transform_0, window_bounds = array<i64: 1, 8, 640>}, {transform_indices = @transform_1, window_bounds = array<i64: 32, 72>}, {transform_indices = @transform_2, window_bounds = array<i64: 32, 1>}, {transform_indices = @transform_3, window_bounds = array<i64: 1, 32, 384>}]} {
    %c384_i32 = arith.constant 384 : i32
    %0 = arith.muli %arg2, %c384_i32 : i32
    %1 = tpu.assume_multiple %0, 128 : i32
    %c0_i32 = arith.constant 0 : i32
    %2 = arith.addi %1, %c0_i32 : i32
    %3 = tpu.assume_multiple %2, 128 : i32
    %c0 = arith.constant 0 : index
    %c0_0 = arith.constant 0 : index
    %4 = arith.index_cast %3 : i32 to index
    %5 = vector.load %arg3[%c0, %c0_0, %4] : memref<1x8x640xbf16, #tpu.memory_space<vmem>>, vector<1x8x384xbf16>
    %6 = vector.shape_cast %5 : vector<1x8x384xbf16> to vector<8x384xbf16>
    %c0_1 = arith.constant 0 : index
    %c0_2 = arith.constant 0 : index
    %7 = vector.load %arg7[%c0_1, %c0_2] : memref<72x384xbf16, #tpu.memory_space<vmem>>, vector<8x384xbf16>
    tpu.vector_store %arg7[%c0_1, %c0_2], %6 {strides = array<i32>} : memref<72x384xbf16, #tpu.memory_space<vmem>>, vector<8x384xbf16>,
    %c0_i32_3 = arith.constant 0 : i32
    %8 = arith.addi %1, %c0_i32_3 : i32
    %9 = tpu.assume_multiple %8, 128 : i32
    %c0_4 = arith.constant 0 : index
    %c0_5 = arith.constant 0 : index
    %10 = arith.index_cast %9 : i32 to index
    %11 = vector.load %arg3[%c0_4, %c0_5, %10] : memref<1x8x640xbf16, #tpu.memory_space<vmem>>, vector<1x8x512xbf16>
    %12 = vector.shape_cast %11 : vector<1x8x512xbf16> to vector<8x512xbf16>
    %13 = vector.extract_strided_slice %12 {offsets = [0, 1], sizes = [8, 384], strides = [1, 1]} : vector<8x512xbf16> to vector<8x384xbf16>
    %c8 = arith.constant 8 : index
    %c0_6 = arith.constant 0 : index
    %14 = vector.load %arg7[%c8, %c0_6] : memref<72x384xbf16, #tpu.memory_space<vmem>>, vector<8x384xbf16>
    tpu.vector_store %arg7[%c8, %c0_6], %13 {strides = array<i32>} : memref<72x384xbf16, #tpu.memory_space<vmem>>, vector<8x384xbf16>,
    %c0_i32_7 = arith.constant 0 : i32
    %15 = arith.addi %1, %c0_i32_7 : i32
    %16 = tpu.assume_multiple %15, 128 : i32
    %c0_8 = arith.constant 0 : index
    %c0_9 = arith.constant 0 : index
    %17 = arith.index_cast %16 : i32 to index
    %18 = vector.load %arg3[%c0_8, %c0_9, %17] : memref<1x8x640xbf16, #tpu.memory_space<vmem>>, vector<1x8x512xbf16>
    %19 = vector.shape_cast %18 : vector<1x8x512xbf16> to vector<8x512xbf16>
    %20 = vector.extract_strided_slice %19 {offsets = [0, 2], sizes = [8, 384], strides = [1, 1]} : vector<8x512xbf16> to vector<8x384xbf16>
    %c16 = arith.constant 16 : index
    %c0_10 = arith.constant 0 : index
    %21 = vector.load %arg7[%c16, %c0_10] : memref<72x384xbf16, #tpu.memory_space<vmem>>, vector<8x384xbf16>
    tpu.vector_store %arg7[%c16, %c0_10], %20 {strides = array<i32>} : memref<72x384xbf16, #tpu.memory_space<vmem>>, vector<8x384xbf16>,
    %c0_i32_11 = arith.constant 0 : i32
    %22 = arith.addi %1, %c0_i32_11 : i32
    %23 = tpu.assume_multiple %22, 128 : i32
    %c0_12 = arith.constant 0 : index
    %c0_13 = arith.constant 0 : index
    %24 = arith.index_cast %23 : i32 to index
    %25 = vector.load %arg3[%c0_12, %c0_13, %24] : memref<1x8x640xbf16, #tpu.memory_space<vmem>>, vector<1x8x512xbf16>
    %26 = vector.shape_cast %25 : vector<1x8x512xbf16> to vector<8x512xbf16>
    %27 = vector.extract_strided_slice %26 {offsets = [0, 18], sizes = [8, 384], strides = [1, 1]} : vector<8x512xbf16> to vector<8x384xbf16>
    %c24 = arith.constant 24 : index
    %c0_14 = arith.constant 0 : index
    %28 = vector.load %arg7[%c24, %c0_14] : memref<72x384xbf16, #tpu.memory_space<vmem>>, vector<8x384xbf16>
    tpu.vector_store %arg7[%c24, %c0_14], %27 {strides = array<i32>} : memref<72x384xbf16, #tpu.memory_space<vmem>>, vector<8x384xbf16>,
    %c0_i32_15 = arith.constant 0 : i32
    %29 = arith.addi %1, %c0_i32_15 : i32
    %30 = tpu.assume_multiple %29, 128 : i32
    %c0_16 = arith.constant 0 : index
    %c0_17 = arith.constant 0 : index
    %31 = arith.index_cast %30 : i32 to index
    %32 = vector.load %arg3[%c0_16, %c0_17, %31] : memref<1x8x640xbf16, #tpu.memory_space<vmem>>, vector<1x8x512xbf16>
    %33 = vector.shape_cast %32 : vector<1x8x512xbf16> to vector<8x512xbf16>
    %34 = vector.extract_strided_slice %33 {offsets = [0, 19], sizes = [8, 384], strides = [1, 1]} : vector<8x512xbf16> to vector<8x384xbf16>
    %c32 = arith.constant 32 : index
    %c0_18 = arith.constant 0 : index
    %35 = vector.load %arg7[%c32, %c0_18] : memref<72x384xbf16, #tpu.memory_space<vmem>>, vector<8x384xbf16>
    tpu.vector_store %arg7[%c32, %c0_18], %34 {strides = array<i32>} : memref<72x384xbf16, #tpu.memory_space<vmem>>, vector<8x384xbf16>,
    %c0_i32_19 = arith.constant 0 : i32
    %36 = arith.addi %1, %c0_i32_19 : i32
    %37 = tpu.assume_multiple %36, 128 : i32
    %c0_20 = arith.constant 0 : index
    %c0_21 = arith.constant 0 : index
    %38 = arith.index_cast %37 : i32 to index
    %39 = vector.load %arg3[%c0_20, %c0_21, %38] : memref<1x8x640xbf16, #tpu.memory_space<vmem>>, vector<1x8x512xbf16>
    %40 = vector.shape_cast %39 : vector<1x8x512xbf16> to vector<8x512xbf16>
    %41 = vector.extract_strided_slice %40 {offsets = [0, 20], sizes = [8, 384], strides = [1, 1]} : vector<8x512xbf16> to vector<8x384xbf16>
    %c40 = arith.constant 40 : index
    %c0_22 = arith.constant 0 : index
    %42 = vector.load %arg7[%c40, %c0_22] : memref<72x384xbf16, #tpu.memory_space<vmem>>, vector<8x384xbf16>
    tpu.vector_store %arg7[%c40, %c0_22], %41 {strides = array<i32>} : memref<72x384xbf16, #tpu.memory_space<vmem>>, vector<8x384xbf16>,
    %c0_i32_23 = arith.constant 0 : i32
    %43 = arith.addi %1, %c0_i32_23 : i32
    %44 = tpu.assume_multiple %43, 128 : i32
    %c0_24 = arith.constant 0 : index
    %c0_25 = arith.constant 0 : index
    %45 = arith.index_cast %44 : i32 to index
    %46 = vector.load %arg3[%c0_24, %c0_25, %45] : memref<1x8x640xbf16, #tpu.memory_space<vmem>>, vector<1x8x512xbf16>
    %47 = vector.shape_cast %46 : vector<1x8x512xbf16> to vector<8x512xbf16>
    %48 = vector.extract_strided_slice %47 {offsets = [0, 36], sizes = [8, 384], strides = [1, 1]} : vector<8x512xbf16> to vector<8x384xbf16>
    %c48 = arith.constant 48 : index
    %c0_26 = arith.constant 0 : index
    %49 = vector.load %arg7[%c48, %c0_26] : memref<72x384xbf16, #tpu.memory_space<vmem>>, vector<8x384xbf16>
    tpu.vector_store %arg7[%c48, %c0_26], %48 {strides = array<i32>} : memref<72x384xbf16, #tpu.memory_space<vmem>>, vector<8x384xbf16>,
    %c0_i32_27 = arith.constant 0 : i32
    %50 = arith.addi %1, %c0_i32_27 : i32
    %51 = tpu.assume_multiple %50, 128 : i32
    %c0_28 = arith.constant 0 : index
    %c0_29 = arith.constant 0 : index
    %52 = arith.index_cast %51 : i32 to index
    %53 = vector.load %arg3[%c0_28, %c0_29, %52] : memref<1x8x640xbf16, #tpu.memory_space<vmem>>, vector<1x8x512xbf16>
    %54 = vector.shape_cast %53 : vector<1x8x512xbf16> to vector<8x512xbf16>
    %55 = vector.extract_strided_slice %54 {offsets = [0, 37], sizes = [8, 384], strides = [1, 1]} : vector<8x512xbf16> to vector<8x384xbf16>
    %c56 = arith.constant 56 : index
    %c0_30 = arith.constant 0 : index
    %56 = vector.load %arg7[%c56, %c0_30] : memref<72x384xbf16, #tpu.memory_space<vmem>>, vector<8x384xbf16>
    tpu.vector_store %arg7[%c56, %c0_30], %55 {strides = array<i32>} : memref<72x384xbf16, #tpu.memory_space<vmem>>, vector<8x384xbf16>,
    %c0_i32_31 = arith.constant 0 : i32
    %57 = arith.addi %1, %c0_i32_31 : i32
    %58 = tpu.assume_multiple %57, 128 : i32
    %c0_32 = arith.constant 0 : index
    %c0_33 = arith.constant 0 : index
    %59 = arith.index_cast %58 : i32 to index
    %60 = vector.load %arg3[%c0_32, %c0_33, %59] : memref<1x8x640xbf16, #tpu.memory_space<vmem>>, vector<1x8x512xbf16>
    %61 = vector.shape_cast %60 : vector<1x8x512xbf16> to vector<8x512xbf16>
    %62 = vector.extract_strided_slice %61 {offsets = [0, 38], sizes = [8, 384], strides = [1, 1]} : vector<8x512xbf16> to vector<8x384xbf16>
    %c64 = arith.constant 64 : index
    %c0_34 = arith.constant 0 : index
    %63 = vector.load %arg7[%c64, %c0_34] : memref<72x384xbf16, #tpu.memory_space<vmem>>, vector<8x384xbf16>
    tpu.vector_store %arg7[%c64, %c0_34], %62 {strides = array<i32>} : memref<72x384xbf16, #tpu.memory_space<vmem>>, vector<8x384xbf16>,
    %c0_35 = arith.constant 0 : index
    %c0_36 = arith.constant 0 : index
    %64 = vector.load %arg4[%c0_35, %c0_36] : memref<32x72xbf16, #tpu.memory_space<vmem>>, vector<32x72xbf16>
    %c0_37 = arith.constant 0 : index
    %c0_38 = arith.constant 0 : index
    %65 = vector.load %arg7[%c0_37, %c0_38] : memref<72x384xbf16, #tpu.memory_space<vmem>>, vector<72x384xbf16>
    %cst = arith.constant dense<0.000000e+00> : vector<32x384xf32>
    %66 = tpu.matmul %64, %65, %cst {dimension_numbers = #tpu.dot_dimension_numbers<[1], [0], [0], [1], [0, 0, 1, 1], [], []>} : vector<32x72xbf16>, vector<72x384xbf16>, vector<32x384xf32> -> vector<32x384xf32>
    %c0_39 = arith.constant 0 : index
    %c0_40 = arith.constant 0 : index
    %67 = vector.load %arg5[%c0_39, %c0_40] : memref<32x1xf32, #tpu.memory_space<vmem>>, vector<32x1xf32>
    %68 = vector.broadcast %67 : vector<32x1xf32> to vector<32x384xf32>
    %69 = arith.addf %66, %68 : vector<32x384xf32>
    %70 = arith.truncf %69 : vector<32x384xf32> to vector<32x384xbf16>
    %c0_41 = arith.constant 0 : index
    %c0_42 = arith.constant 0 : index
    %c0_43 = arith.constant 0 : index
    %71 = vector.load %arg6[%c0_41, %c0_42, %c0_43] : memref<1x32x384xbf16, #tpu.memory_space<vmem>>, vector<1x32x384xbf16>
    %72 = vector.shape_cast %71 : vector<1x32x384xbf16> to vector<32x384xbf16>
    %73 = vector.shape_cast %70 : vector<32x384xbf16> to vector<1x32x384xbf16>
    tpu.vector_store %arg6[%c0_41, %c0_42, %c0_43], %73 {strides = array<i32>} : memref<1x32x384xbf16, #tpu.memory_space<vmem>>, vector<1x32x384xbf16>,
    return
  }
  func.func @transform_0(%arg0: i32, %arg1: i32, %arg2: i32) -> (i32, i32, i32) {
    %c0_i32 = arith.constant 0 : i32
    %c0_i32_0 = arith.constant 0 : i32
    %c0_i32_1 = arith.constant 0 : i32
    return %arg0, %c0_i32, %c0_i32_0 : i32, i32, i32
  }
  func.func @transform_1(%arg0: i32, %arg1: i32, %arg2: i32) -> (i32, i32) {
    %c0_i32 = arith.constant 0 : i32
    %c0_i32_0 = arith.constant 0 : i32
    return %arg1, %c0_i32 : i32, i32
  }
  func.func @transform_2(%arg0: i32, %arg1: i32, %arg2: i32) -> (i32, i32) {
    %c0_i32 = arith.constant 0 : i32
    %c0_i32_0 = arith.constant 0 : i32
    return %arg1, %c0_i32 : i32, i32
  }
  func.func @transform_3(%arg0: i32, %arg1: i32, %arg2: i32) -> (i32, i32, i32) {
    %c0_i32 = arith.constant 0 : i32
    return %arg0, %arg1, %arg2 : i32, i32, i32
  }
}

</mosaic_0001>

<llo_original>
// kernel: tpu_custom_call.1
$region0: #{tpu_custom_call.1}
  #allocation0 [shape = 'u32[]', space=smem, size = 0x4, offset = 0x4, fixed_abs, tag = 'smem constant byte address 0x4 - core index']
  #allocation1 [shape = 'u32[144,128]{1,0:T(1,128)}', space=vmem, size = 0x12000, scoped, tag = 'internal scratch']
  #allocation2 [shape = 'bf16[72,384]{1,0:T(8,128)(2,1)}', space=vmem, size = 0xd800, scoped, tag = 'scratch operand']
  %s0 = inlined_call_operand.hbm [shape: bf16[2,8,640], index: 0, kind: input, shape index: {}]
  %s1 = inlined_call_operand.vmem [shape: bf16[32,72], index: 1, kind: input, shape index: {}]
  %s2 = inlined_call_operand.vmem [shape: f32[32,1], index: 2, kind: input, shape index: {}]
  %s3 = inlined_call_operand.hbm [shape: bf16[2,32,384], index: 3, kind: output, shape index: {}]
  %s4 = sld [smem:[#allocation0]]
  $region49: #{tpu_custom_call.1} parent=0
    _
  %s6 = ssub.s32 1, %s4
  %s7 = scalar_select 0, %s6, %s4
  $region1: #{tpu_custom_call.1} parent=0
    #allocation3 [shape = 'u8[20480]{0}', space=vmem, size = 0x5000, scoped, tag = 'input window, operand 0']
    #allocation4 [shape = 's32[2]{0}', space=sflag, size = 0x8, scoped, tag = 'scoped memory for tpu_custom_call.1']
    #allocation5 [shape = 's32[2]{0}', space=sflag, size = 0x8, scoped, tag = 'scoped memory for tpu_custom_call.1']
    #allocation6 [shape = 'u8[49152]{0}', space=vmem, size = 0xc000, scoped, tag = 'output window, operand 0']
    %8 = vsyncpa [#allocation4], 0
    %s9 = scalar_lea.sflag [#allocation4], 1
    %10 = vsyncpa %s9, 0
    %11 = vsyncpa [#allocation5], 0
    %s12 = scalar_lea.sflag [#allocation5], 1
    %13 = vsyncpa %s12, 0
    loop: start=0, step=1, limit=4
    $region2: #{tpu_custom_call.1} parent=1 // loop_pre_header
      _
    $region3: #{tpu_custom_call.1} parent=1 // loop_header
      %s15 = sphi 0, %s19
      %p16 = scmp.ge.s32.totalorder %s15, 4
      %s22 = sphi 0, %s41
      %s23 = sphi 0, %s37
      %s24 = sphi 0, %s33
      %s25 = sphi 0, %s22
      %s26 = sphi 0, %s23
      %s27 = sphi 0, %s24
      %s28 = sphi 0, %s25
      %s29 = sphi 0, %s26
      %s30 = sphi 0, %s27
      %s44 = sphi 0, %s46
      %s47 = sphi 0, %s44
      %s48 = sphi 0, %s47
      %s64 = sphi 0, %s48
      %s70 = sphi 0, %s72
      %s73 = sphi 0, %s70
      %s74 = sphi 0, %s73
      %s90 = sphi 0, %s74
      %s96 = sphi 0, %s98
      %s99 = sphi 0, %s96
      %s100 = sphi 0, %s99
      %s116 = sphi 0, %s100
      %s126 = sphi 0, %s128
      %s129 = sphi 0, %s126
      %s130 = sphi 0, %s129
      %s146 = sphi 0, %s130
    $region4: #{tpu_custom_call.1} parent=1 // loop_header_branch
      %18 = sbr.rel (%p16) target = $region8
    $region5: #{tpu_custom_call.1} parent=1 // loop_body
      %s20 = ssub.s32 %s15, 1
      %s21 = ssub.s32 %s15, 2
      %s31 = sadd.s32 1, %s24
      %p32 = scmp.ge.s32.totalorder %s31, 1
      %s33 = scalar_select %p32, 0, %s31
      %s34 = sadd.s32 1, %s23
      %s35 = scalar_select %p32, %s34, %s23
      %p36 = scmp.ge.s32.totalorder %s35, 1
      %s37 = scalar_select %p36, 0, %s35
      %s38 = sadd.s32 1, %s22
      %s39 = scalar_select %p36, %s38, %s22
      %p40 = scmp.ge.s32.totalorder %s39, 2
      %s41 = scalar_select %p40, 0, %s39
      %s42 = ssub.s32 %s22, %s41
      %p43 = scmp.eq.s32.totalorder %s42, 0
      %s45 = sadd.s32 %s44, 1
      %s46 = scalar_select %p43, %s44, %s45
      %p49 = pneg %p43
      %p50 = scmp.eq.s32.totalorder %s15, 1
      %p51 = por %p49, %p50
      %p52 = scmp.ne.s32.totalorder %s44, %s47
      %p53 = scmp.eq.s32.totalorder %s15, 0
      %p54 = por %p52, %p53
      %p55 = scmp.ne.s32.totalorder %s44, %s47
      %p56 = scmp.eq.s32.totalorder %s20, 1
      %p57 = por %p55, %p56
      %p58 = scmp.ne.s32.totalorder %s47, %s48
      %p59 = scmp.eq.s32.totalorder %s20, 0
      %p60 = por %p58, %p59
      %p61 = scmp.ne.s32.totalorder %s47, %s48
      %p62 = scmp.eq.s32.totalorder %s21, 1
      %p63 = por %p61, %p62
      %p65 = scmp.ne.s32.totalorder %s48, %s64
      %p66 = scmp.eq.s32.totalorder %s21, 0
      %p67 = por %p65, %p66
      %s68 = ssub.s32 %s23, %s37
      %p69 = scmp.eq.s32.totalorder %s68, 0
      %s71 = sadd.s32 %s70, 1
      %s72 = scalar_select %p69, %s70, %s71
      %p75 = pneg %p69
      %p76 = scmp.eq.s32.totalorder %s15, 1
      %p77 = por %p75, %p76
      %p78 = scmp.ne.s32.totalorder %s70, %s73
      %p79 = scmp.eq.s32.totalorder %s15, 0
      %p80 = por %p78, %p79
      %p81 = scmp.ne.s32.totalorder %s70, %s73
      %p82 = scmp.eq.s32.totalorder %s20, 1
      %p83 = por %p81, %p82
      %p84 = scmp.ne.s32.totalorder %s73, %s74
      %p85 = scmp.eq.s32.totalorder %s20, 0
      %p86 = por %p84, %p85
      %p87 = scmp.ne.s32.totalorder %s73, %s74
      %p88 = scmp.eq.s32.totalorder %s21, 1
      %p89 = por %p87, %p88
      %p91 = scmp.ne.s32.totalorder %s74, %s90
      %p92 = scmp.eq.s32.totalorder %s21, 0
      %p93 = por %p91, %p92
      %s94 = ssub.s32 %s23, %s37
      %p95 = scmp.eq.s32.totalorder %s94, 0
      %s97 = sadd.s32 %s96, 1
      %s98 = scalar_select %p95, %s96, %s97
      %p101 = pneg %p95
      %p102 = scmp.eq.s32.totalorder %s15, 1
      %p103 = por %p101, %p102
      %p104 = scmp.ne.s32.totalorder %s96, %s99
      %p105 = scmp.eq.s32.totalorder %s15, 0
      %p106 = por %p104, %p105
      %p107 = scmp.ne.s32.totalorder %s96, %s99
      %p108 = scmp.eq.s32.totalorder %s20, 1
      %p109 = por %p107, %p108
      %p110 = scmp.ne.s32.totalorder %s99, %s100
      %p111 = scmp.eq.s32.totalorder %s20, 0
      %p112 = por %p110, %p111
      %p113 = scmp.ne.s32.totalorder %s99, %s100
      %p114 = scmp.eq.s32.totalorder %s21, 1
      %p115 = por %p113, %p114
      %p117 = scmp.ne.s32.totalorder %s100, %s116
      %p118 = scmp.eq.s32.totalorder %s21, 0
      %p119 = por %p117, %p118
      %s120 = ssub.s32 %s22, %s41
      %s121 = ssub.s32 %s23, %s37
      %s122 = sor.u32 %s120, %s121
      %s123 = ssub.s32 %s24, %s33
      %s124 = sor.u32 %s122, %s123
      %p125 = scmp.eq.s32.totalorder %s124, 0
      %s127 = sadd.s32 %s126, 1
      %s128 = scalar_select %p125, %s126, %s127
      %p131 = pneg %p125
      %p132 = scmp.eq.s32.totalorder %s15, 1
      %p133 = por %p131, %p132
      %p134 = scmp.ne.s32.totalorder %s126, %s129
      %p135 = scmp.eq.s32.totalorder %s15, 0
      %p136 = por %p134, %p135
      %p137 = scmp.ne.s32.totalorder %s126, %s129
      %p138 = scmp.eq.s32.totalorder %s20, 1
      %p139 = por %p137, %p138
      %p140 = scmp.ne.s32.totalorder %s129, %s130
      %p141 = scmp.eq.s32.totalorder %s20, 0
      %p142 = por %p140, %p141
      %p143 = scmp.ne.s32.totalorder %s129, %s130
      %p144 = scmp.eq.s32.totalorder %s21, 1
      %p145 = por %p143, %p144
      %p147 = scmp.ne.s32.totalorder %s130, %s146
      %p148 = scmp.eq.s32.totalorder %s21, 0
      %p149 = por %p147, %p148
      %p150 = scmp.le.s32.totalorder 1, %s15
      %p151 = scmp.lt.s32.totalorder %s15, 3
      %p152 = pnand %p150, %p151
      %p153 = pneg %p152
      // Predicated region
      $region9: #{tpu_custom_call.1} parent=5 // pred_check
        _
      $region10: #{tpu_custom_call.1} parent=5 // pred_check_branch
        %155 = sbr.rel (%p152) target = $region12
      $region11: #{tpu_custom_call.1} parent=5 // pred_region
        %s156 = ssub.s32 %s15, 1
        // Predicated region
        $region13: #{tpu_custom_call.1} parent=11 // pred_check
          %p157 = pneg %p86
        $region14: #{tpu_custom_call.1} parent=11 // pred_check_branch
          %159 = sbr.rel (%p157) target = $region16
        $region15: #{tpu_custom_call.1} parent=11 // pred_region
          %s160 = smul.u32 4, %s26
          %p161 = scmp.lt.s32.totalorder %s160, 3
          %s162 = scalar_select %p161, %s160, 3
          %s163 = smul.addr %s162, 4
          %s164 = scalar_lea.vmem %s1, %s163
          %s165 = smul.u32 4, %s26
        $region16: #{tpu_custom_call.1} parent=11 // pred_fallthru
          _
        // Predicated region
        $region17: #{tpu_custom_call.1} parent=11 // pred_check
          %p166 = pneg %p112
        $region18: #{tpu_custom_call.1} parent=11 // pred_check_branch
          %168 = sbr.rel (%p166) target = $region20
        $region19: #{tpu_custom_call.1} parent=11 // pred_region
          %s169 = smul.u32 4, %s26
          %p170 = scmp.lt.s32.totalorder %s169, 3
          %s171 = scalar_select %p170, %s169, 3
          %s172 = smul.addr %s171, 8
          %s173 = scalar_lea.vmem %s2, %s172
          %s174 = smul.u32 4, %s26
        $region20: #{tpu_custom_call.1} parent=11 // pred_fallthru
          _
      $region12: #{tpu_custom_call.1} parent=5 // pred_fallthru
        _
      %p175 = scmp.lt.s32.totalorder %s15, 2
      // Predicated region
      $region21: #{tpu_custom_call.1} parent=5 // pred_check
        %p176 = pneg %p175
      $region22: #{tpu_custom_call.1} parent=5 // pred_check_branch
        %178 = sbr.rel (%p176) target = $region24
      $region23: #{tpu_custom_call.1} parent=5 // pred_region
        // Predicated region
        $region25: #{tpu_custom_call.1} parent=23 // pred_check
          %p179 = pneg %p54
        $region26: #{tpu_custom_call.1} parent=23 // pred_check_branch
          %181 = sbr.rel (%p179) target = $region28
        $region27: #{tpu_custom_call.1} parent=23 // pred_region
          %s182 = sand.u32 %s44, 1
          %s183 = scalar_lea.sflag [#allocation4], %s182
          %s184 = sand.u32 %s44, 1
          %s185 = smul.addr %s184, 20
          %s186 = scalar_lea.vmem [#allocation3], %s185
          %s188 = ssub.s32 320, 320
          %189 = vsyncadd %s183, %s188
          %s190 = smul.addr %s22, 5
          %s191 = smul.addr %s190, 64
          %s192 = scalar_lea.hbm %s0, %s191
          %s194 = sshll.u32 %s186, 4
          %s195 = int_to_ptr.vmem [resolvable:$true] %s194
          %197 = dma.hbm_to_vmem [thread:$0]  %s192, 320, %s195, %s183
        $region28: #{tpu_custom_call.1} parent=23 // pred_fallthru
          _
      $region24: #{tpu_custom_call.1} parent=5 // pred_fallthru
        _
      %p198 = scmp.le.s32.totalorder 1, %s15
      %p199 = scmp.lt.s32.totalorder %s15, 3
      %p200 = pnand %p198, %p199
      %p201 = pneg %p200
      // Predicated region
      $region29: #{tpu_custom_call.1} parent=5 // pred_check
        _
      $region30: #{tpu_custom_call.1} parent=5 // pred_check_branch
        %203 = sbr.rel (%p200) target = $region32
      $region31: #{tpu_custom_call.1} parent=5 // pred_region
        %s204 = ssub.s32 %s15, 1
        %s205 = sand.u32 %s47, 1
        %s206 = scalar_lea.sflag [#allocation4], %s205
        %s207 = sand.u32 %s47, 1
        %s208 = smul.addr %s207, 20
        %s209 = scalar_lea.vmem [#allocation3], %s208
        // Predicated region
        $region33: #{tpu_custom_call.1} parent=31 // pred_check
          %p210 = pneg %p60
        $region34: #{tpu_custom_call.1} parent=31 // pred_check_branch
          %212 = sbr.rel (%p210) target = $region36
        $region35: #{tpu_custom_call.1} parent=31 // pred_region
          %213 = dma.done %s206, 320
        $region36: #{tpu_custom_call.1} parent=31 // pred_fallthru
          _
        %s214 = sand.u32 %s47, 1
        %s215 = scalar_lea.sflag [#allocation4], %s214
        %s216 = sand.u32 %s47, 1
        %s217 = smul.addr %s216, 20
        %s218 = scalar_lea.vmem [#allocation3], %s217
        %p219 = pneg %p60
        %p220 = pneg %p57
        %s221 = smul.u32 4, %s26
        %p222 = scmp.lt.s32.totalorder %s221, 3
        %s223 = scalar_select %p222, %s221, 3
        %s224 = smul.addr %s223, 4
        %s225 = scalar_lea.vmem %s1, %s224
        %p226 = pneg %p86
        %p227 = pneg %p83
        %s228 = smul.u32 4, %s26
        %p229 = scmp.lt.s32.totalorder %s228, 3
        %s230 = scalar_select %p229, %s228, 3
        %s231 = smul.addr %s230, 8
        %s232 = scalar_lea.vmem %s2, %s231
        %p233 = pneg %p112
        %p234 = pneg %p109
        %p235 = pneg %p142
        %p236 = pneg %p139
        %s237 = sand.u32 %s129, 1
        %s238 = scalar_lea.sflag [#allocation5], %s237
        %s239 = sand.u32 %s129, 1
        %s240 = smul.addr %s239, 48
        %s241 = scalar_lea.vmem [#allocation6], %s240
        %s242 = smul.u32 4, %s26
        %p243 = scmp.lt.s32.totalorder %s242, 3
        %s244 = scalar_select %p243, %s242, 3
        %s245 = smul.addr %s244, 4
        %s246 = scalar_lea.vmem %s1, %s245
        %s247 = smul.u32 4, %s26
        %s248 = smul.u32 4, %s26
        %p249 = scmp.lt.s32.totalorder %s248, 3
        %s250 = scalar_select %p249, %s248, 3
        %s251 = smul.addr %s250, 8
        %s252 = scalar_lea.vmem %s2, %s251
        %s253 = smul.u32 4, %s26
        %s254 = smul.u32 4, %s26
        %s255 = smul.u32 3, %s27
        %s257 = smul.u32 %s27, 384
        %s258 = sshra.s32 %s257, 7
        %s259 = sand.u32 %s257, 127
        %s260 = smul.addr %s258, 4
        %s261 = scalar_lea.vmem %s209, %s260 [#allocation3]
        %v262 = vld [vmem:[%s261] sm:$0xff]
        %v263 = vld [vmem:[%s261 + $0x8] sm:$0xf]
        %264 = vst [vmem:[#allocation2] sm:$0xff] %v262
        %265 = vst [vmem:[#allocation2 + $0x8] sm:$0xf] %v263
        %v266 = vld [vmem:[%s261] sm:$0xff]
        %v267 = vld [vmem:[%s261 + $0x8] sm:$0xff]
        %270 = vrot.lane.b32.xlu0 %v266, 127
        %v271 = vpop.permute.xlu0 %270
        %272 = vrot.lane.b32.xlu0 %v267, 127
        %v273 = vpop.permute.xlu0 %272
        %v274 = vrot.slane %v271, 4
        %v275 = vrot.slane %v273, 4
        %vm276 = vcmask 1043456
        %v277 = vsel %vm276, %v274, %v275
        %vm278 = vcmask 1039360
        %v279 = vsel %vm278, %v271, %v277
        %v280 = vsel %vm278, %v273, %v275
        %283 = vst [vmem:[#allocation2 + $0xc] sm:$0xff] %v279
        %284 = vst [vmem:[#allocation2 + $0x14] sm:$0xf] %v280
        %v285 = vld [vmem:[%s261] sm:$0xff]
        %v286 = vld [vmem:[%s261 + $0x8] sm:$0xff]
        %289 = vrot.lane.b32.xlu0 %v285, 126
        %v290 = vpop.permute.xlu0 %289
        %291 = vrot.lane.b32.xlu0 %v286, 126
        %v292 = vpop.permute.xlu0 %291
        %v293 = vrot.slane %v290, 4
        %v294 = vrot.slane %v292, 4
        %v295 = vsel %vm276, %v293, %v294
        %vm296 = vcmask 1031168
        %v297 = vsel %vm296, %v290, %v295
        %v298 = vsel %vm296, %v292, %v294
        %301 = vst [vmem:[#allocation2 + $0x18] sm:$0xff] %v297
        %302 = vst [vmem:[#allocation2 + $0x20] sm:$0xf] %v298
        %v303 = vld [vmem:[%s261] sm:$0xff]
        %v304 = vld [vmem:[%s261 + $0x8] sm:$0xff]
        %307 = vrot.lane.b32.xlu0 %v303, 110
        %v308 = vpop.permute.xlu0 %307
        %309 = vrot.lane.b32.xlu0 %v304, 110
        %v310 = vpop.permute.xlu0 %309
        %v311 = vrot.slane %v308, 4
        %v312 = vrot.slane %v310, 4
        %v313 = vsel %vm276, %v311, %v312
        %vm314 = vcmask 900096
        %v315 = vsel %vm314, %v308, %v313
        %v316 = vsel %vm314, %v310, %v312
        %319 = vst [vmem:[#allocation2 + $0x24] sm:$0xff] %v315
        %320 = vst [vmem:[#allocation2 + $0x2c] sm:$0xf] %v316
        %v321 = vld [vmem:[%s261] sm:$0xff]
        %v322 = vld [vmem:[%s261 + $0x8] sm:$0xff]
        %325 = vrot.lane.b32.xlu0 %v321, 109
        %v326 = vpop.permute.xlu0 %325
        %327 = vrot.lane.b32.xlu0 %v322, 109
        %v328 = vpop.permute.xlu0 %327
        %v329 = vrot.slane %v326, 4
        %v330 = vrot.slane %v328, 4
        %v331 = vsel %vm276, %v329, %v330
        %vm332 = vcmask 891904
        %v333 = vsel %vm332, %v326, %v331
        %v334 = vsel %vm332, %v328, %v330
        %337 = vst [vmem:[#allocation2 + $0x30] sm:$0xff] %v333
        %338 = vst [vmem:[#allocation2 + $0x38] sm:$0xf] %v334
        %v339 = vld [vmem:[%s261] sm:$0xff]
        %v340 = vld [vmem:[%s261 + $0x8] sm:$0xff]
        %343 = vrot.lane.b32.xlu0 %v339, 108
        %v344 = vpop.permute.xlu0 %343
        %345 = vrot.lane.b32.xlu0 %v340, 108
        %v346 = vpop.permute.xlu0 %345
        %v347 = vrot.slane %v344, 4
        %v348 = vrot.slane %v346, 4
        %v349 = vsel %vm276, %v347, %v348
        %vm350 = vcmask 883712
        %v351 = vsel %vm350, %v344, %v349
        %v352 = vsel %vm350, %v346, %v348
        %355 = vst [vmem:[#allocation2 + $0x3c] sm:$0xff] %v351
        %356 = vst [vmem:[#allocation2 + $0x44] sm:$0xf] %v352
        %v357 = vld [vmem:[%s261] sm:$0xff]
        %v358 = vld [vmem:[%s261 + $0x8] sm:$0xff]
        %361 = vrot.lane.b32.xlu0 %v357, 92
        %v362 = vpop.permute.xlu0 %361
        %363 = vrot.lane.b32.xlu0 %v358, 92
        %v364 = vpop.permute.xlu0 %363
        %v365 = vrot.slane %v362, 4
        %v366 = vrot.slane %v364, 4
        %v367 = vsel %vm276, %v365, %v366
        %vm368 = vcmask 752640
        %v369 = vsel %vm368, %v362, %v367
        %v370 = vsel %vm368, %v364, %v366
        %373 = vst [vmem:[#allocation2 + $0x48] sm:$0xff] %v369
        %374 = vst [vmem:[#allocation2 + $0x50] sm:$0xf] %v370
        %v375 = vld [vmem:[%s261] sm:$0xff]
        %v376 = vld [vmem:[%s261 + $0x8] sm:$0xff]
        %379 = vrot.lane.b32.xlu0 %v375, 91
        %v380 = vpop.permute.xlu0 %379
        %381 = vrot.lane.b32.xlu0 %v376, 91
        %v382 = vpop.permute.xlu0 %381
        %v383 = vrot.slane %v380, 4
        %v384 = vrot.slane %v382, 4
        %v385 = vsel %vm276, %v383, %v384
        %vm386 = vcmask 744448
        %v387 = vsel %vm386, %v380, %v385
        %v388 = vsel %vm386, %v382, %v384
        %391 = vst [vmem:[#allocation2 + $0x54] sm:$0xff] %v387
        %392 = vst [vmem:[#allocation2 + $0x5c] sm:$0xf] %v388
        %v393 = vld [vmem:[%s261] sm:$0xff]
        %v394 = vld [vmem:[%s261 + $0x8] sm:$0xff]
        %397 = vrot.lane.b32.xlu0 %v393, 90
        %v398 = vpop.permute.xlu0 %397
        %399 = vrot.lane.b32.xlu0 %v394, 90
        %v400 = vpop.permute.xlu0 %399
        %v401 = vrot.slane %v398, 4
        %v402 = vrot.slane %v400, 4
        %v403 = vsel %vm276, %v401, %v402
        %vm404 = vcmask 736256
        %v405 = vsel %vm404, %v398, %v403
        %v406 = vsel %vm404, %v400, %v402
        %409 = vst [vmem:[#allocation2 + $0x60] sm:$0xff] %v405
        %410 = vst [vmem:[#allocation2 + $0x68] sm:$0xf] %v406
        %v411 = vld [vmem:[%s246] sm:$0xf]
        %v412 = vld [vmem:[%s246 + $0x4] sm:$0xf]
        %v413 = vld [vmem:[%s246 + $0x8] sm:$0xf]
        %v414 = vld [vmem:[%s246 + $0xc] sm:$0xf]
        %v415 = vld [vmem:[#allocation2] sm:$0xff]
        %v416 = vld [vmem:[#allocation2 + $0x8] sm:$0xf]
        %v417 = vld [vmem:[#allocation2 + $0xc] sm:$0xff]
        %v418 = vld [vmem:[#allocation2 + $0x14] sm:$0xf]
        %v419 = vld [vmem:[#allocation2 + $0x18] sm:$0xff]
        %v420 = vld [vmem:[#allocation2 + $0x20] sm:$0xf]
        %v421 = vld [vmem:[#allocation2 + $0x24] sm:$0xff]
        %v422 = vld [vmem:[#allocation2 + $0x2c] sm:$0xf]
        %v423 = vld [vmem:[#allocation2 + $0x30] sm:$0xff]
        %v424 = vld [vmem:[#allocation2 + $0x38] sm:$0xf]
        %v425 = vld [vmem:[#allocation2 + $0x3c] sm:$0xff]
        %v426 = vld [vmem:[#allocation2 + $0x44] sm:$0xf]
        %v427 = vld [vmem:[#allocation2 + $0x48] sm:$0xff]
        %v428 = vld [vmem:[#allocation2 + $0x50] sm:$0xf]
        %v429 = vld [vmem:[#allocation2 + $0x54] sm:$0xff]
        %v430 = vld [vmem:[#allocation2 + $0x5c] sm:$0xf]
        %v431 = vld [vmem:[#allocation2 + $0x60] sm:$0xff]
        %v432 = vld [vmem:[#allocation2 + $0x68] sm:$0xf]
        %v433 = vld [vmem:[%s252] sm:$0xff]
        %v434 = vld [vmem:[%s252 + $0x8] sm:$0xff]
        %v435 = vld [vmem:[%s252 + $0x10] sm:$0xff]
        %v436 = vld [vmem:[%s252 + $0x18] sm:$0xff]
        %438 = vset.pattern.permute.xlu0 0
        %439 = vperm.xlu0 %438, %v433
        %v440 = vpop.permute.xlu0 %439
        %443 = vset.pattern.permute.xlu0 0
        %444 = vperm.xlu0 %443, %v434
        %v445 = vpop.permute.xlu0 %444
        %448 = vset.pattern.permute.xlu0 0
        %449 = vperm.xlu0 %448, %v435
        %v450 = vpop.permute.xlu0 %449
        %453 = vset.pattern.permute.xlu0 0
        %454 = vperm.xlu0 %453, %v436
        %v455 = vpop.permute.xlu0 %454
        %v461 = vunpack.c.l.b16 %v411
        %v462 = vunpack.c.l.b16 %v412
        %v463 = vunpack.c.l.b16 %v413
        %v464 = vunpack.c.l.b16 %v414
        %v465 = vpack.c.b16 %v462, %v461
        %v466 = vpack.c.b16 %v464, %v463
        %v485 = vunpack.c.l.b16 %v415
        %v486 = vunpack.c.h.b16 %v415
        %v487 = vunpack.c.l.b16 %v416
        %v488 = vunpack.c.l.b16 %v417
        %v489 = vunpack.c.h.b16 %v417
        %v490 = vunpack.c.l.b16 %v418
        %v491 = vunpack.c.l.b16 %v419
        %v492 = vunpack.c.h.b16 %v419
        %v493 = vunpack.c.l.b16 %v420
        %v494 = vunpack.c.l.b16 %v421
        %v495 = vunpack.c.h.b16 %v421
        %v496 = vunpack.c.l.b16 %v422
        %v497 = vunpack.c.l.b16 %v423
        %v498 = vunpack.c.h.b16 %v423
        %v499 = vunpack.c.l.b16 %v424
        %v500 = vunpack.c.l.b16 %v425
        %v501 = vunpack.c.h.b16 %v425
        %v502 = vunpack.c.l.b16 %v426
        %v503 = vunpack.c.l.b16 %v427
        %v504 = vunpack.c.h.b16 %v427
        %v505 = vunpack.c.l.b16 %v428
        %v506 = vunpack.c.l.b16 %v429
        %v507 = vunpack.c.h.b16 %v429
        %v508 = vunpack.c.l.b16 %v430
        %v509 = vunpack.c.l.b16 %v431
        %v510 = vunpack.c.h.b16 %v431
        %v511 = vunpack.c.l.b16 %v432
        %v512 = vpack.c.b16 %v488, %v485
        %v513 = vpack.c.b16 %v489, %v486
        %v514 = vpack.c.b16 %v490, %v487
        %v515 = vpack.c.b16 %v494, %v491
        %v516 = vpack.c.b16 %v495, %v492
        %v517 = vpack.c.b16 %v496, %v493
        %v518 = vpack.c.b16 %v500, %v497
        %v519 = vpack.c.b16 %v501, %v498
        %v520 = vpack.c.b16 %v502, %v499
        %v521 = vpack.c.b16 %v506, %v503
        %v522 = vpack.c.b16 %v507, %v504
        %v523 = vpack.c.b16 %v508, %v505
        %v524 = vpack.c.b16 %v509, %v509
        %v525 = vpack.c.b16 %v510, %v510
        %v526 = vpack.c.b16 %v511, %v511
        %vm539 = vcmask 588800
        %v541 = vsel %vm539, %v465, 0
        %v544 = vsel %vm539, %v466, 0
        %vm546 = vcmask 1043456
        %v548 = vsel %vm546, %v524, 0
        %v551 = vsel %vm546, %v525, 0
        %v554 = vsel %vm546, %v526, 0
        %556 = vmatprep.subr.bf16.mxu0 %v513
        %557 = vmatpush1.bf16.msra.mxu0 %v512
        %558 = vmatprep.subr.bf16.mxu0 %v516
        %559 = vmatpush1.bf16.msra.mxu0 %v515
        %560 = vmatprep.subr.bf16.mxu0 %v519
        %561 = vmatpush1.bf16.msra.mxu0 %v518
        %562 = vmatprep.subr.bf16.mxu0 %v522
        %563 = vmatpush1.bf16.msra.mxu0 %v521
        %564 = vmatprep.subr.bf16.mxu0 %v551
        %565 = vmatpush1.bf16.msra.mxu0 %v548
        %566 = vmatprep.subr.bf16.mxu0 0
        %567 = vmatpush1.bf16.msra.mxu0 0
        %568 = vmatprep.subr.bf16.mxu0 0
        %569 = vmatpush1.bf16.msra.mxu0 0
        %570 = vmatprep.subr.bf16.mxu0 0
        %571 = vmatpush1.bf16.msra.mxu0 0
        %572 = vmatprep.subr.bf16.mxu0 0
        %573 = vmatpush1.bf16.msra.mxu0 0
        %574 = vmatprep.subr.bf16.mxu0 0
        %575 = vmatpush1.bf16.msra.mxu0 0
        %576 = vmatprep.subr.bf16.mxu0 0
        %577 = vmatpush1.bf16.msra.mxu0 0
        %578 = vmatprep.subr.bf16.mxu0 0
        %579 = vmatpush1.bf16.msra.mxu0 0
        %580 = vmatprep.subr.bf16.mxu0 0
        %581 = vmatpush1.bf16.msra.mxu0 0
        %582 = vmatprep.subr.bf16.mxu0 0
        %583 = vmatpush1.bf16.msra.mxu0 0
        %584 = vmatprep.subr.bf16.mxu0 0
        %585 = vmatpush1.bf16.msra.mxu0 0
        %586 = vmatprep.subr.bf16.mxu0 0
        %587 = vmatpush1.bf16.msra.mxu0 0
        %588 = vmatprep.mubr.bf16.mxu0 0
        %589 = vmatmul.mubr.bf16.gmra.mrb[0].mxu0 %v541
        %v590 = vpop.f32.mrb[0].mxu0
        %v591 = vadd.f32 %v440, %v590
        %v592 = vpop.f32.mrb[0].mxu0
        %v593 = vadd.f32 %v440, %v592
        %v594 = vpop.f32.mrb[0].mxu0
        %v595 = vadd.f32 %v445, %v594
        %v596 = vpop.f32.mrb[0].mxu0
        %v597 = vadd.f32 %v445, %v596
        %598 = vmatprep.mubr.bf16.mxu0 0
        %599 = vmatmul.mubr.bf16.gmra.mrb[0].mxu0 %v544
        %v600 = vpop.f32.mrb[0].mxu0
        %v601 = vadd.f32 %v450, %v600
        %v602 = vpop.f32.mrb[0].mxu0
        %v603 = vadd.f32 %v450, %v602
        %v604 = vpop.f32.mrb[0].mxu0
        %v605 = vadd.f32 %v455, %v604
        %v606 = vpop.f32.mrb[0].mxu0
        %v607 = vadd.f32 %v455, %v606
        %608 = vdwg.mxu0
        %609 = vmatprep.subr.bf16.mxu0 0
        %610 = vmatpush1.bf16.msra.mxu0 %v514
        %611 = vmatprep.subr.bf16.mxu0 0
        %612 = vmatpush1.bf16.msra.mxu0 %v517
        %613 = vmatprep.subr.bf16.mxu0 0
        %614 = vmatpush1.bf16.msra.mxu0 %v520
        %615 = vmatprep.subr.bf16.mxu0 0
        %616 = vmatpush1.bf16.msra.mxu0 %v523
        %617 = vmatprep.subr.bf16.mxu0 0
        %618 = vmatpush1.bf16.msra.mxu0 %v554
        %619 = vmatprep.subr.bf16.mxu0 0
        %620 = vmatpush1.bf16.msra.mxu0 0
        %621 = vmatprep.subr.bf16.mxu0 0
        %622 = vmatpush1.bf16.msra.mxu0 0
        %623 = vmatprep.subr.bf16.mxu0 0
        %624 = vmatpush1.bf16.msra.mxu0 0
        %625 = vmatprep.subr.bf16.mxu0 0
        %626 = vmatpush1.bf16.msra.mxu0 0
        %627 = vmatprep.subr.bf16.mxu0 0
        %628 = vmatpush1.bf16.msra.mxu0 0
        %629 = vmatprep.subr.bf16.mxu0 0
        %630 = vmatpush1.bf16.msra.mxu0 0
        %631 = vmatprep.subr.bf16.mxu0 0
        %632 = vmatpush1.bf16.msra.mxu0 0
        %633 = vmatprep.subr.bf16.mxu0 0
        %634 = vmatpush1.bf16.msra.mxu0 0
        %635 = vmatprep.subr.bf16.mxu0 0
        %636 = vmatpush1.bf16.msra.mxu0 0
        %637 = vmatprep.subr.bf16.mxu0 0
        %638 = vmatpush1.bf16.msra.mxu0 0
        %639 = vmatprep.subr.bf16.mxu0 0
        %640 = vmatpush1.bf16.msra.mxu0 0
        %641 = vmatprep.mubr.bf16.mxu0 0
        %642 = vmatmul.mubr.bf16.gmra.mrb[0].mxu0 %v541
        %v643 = vpop.f32.mrb[0].mxu0
        %v644 = vadd.f32 %v440, %v643
        %v645 = vpop.f32.mrb[0].mxu0
        %v646 = vpop.f32.mrb[0].mxu0
        %v647 = vadd.f32 %v445, %v646
        %v648 = vpop.f32.mrb[0].mxu0
        %649 = vmatprep.mubr.bf16.mxu0 0
        %650 = vmatmul.mubr.bf16.gmra.mrb[0].mxu0 %v544
        %v651 = vpop.f32.mrb[0].mxu0
        %v652 = vadd.f32 %v450, %v651
        %v653 = vpop.f32.mrb[0].mxu0
        %v654 = vpop.f32.mrb[0].mxu0
        %v655 = vadd.f32 %v455, %v654
        %v656 = vpop.f32.mrb[0].mxu0
        %657 = vdwg.mxu0
        %v658 = vpack.c.bf16 %v595, %v591
        %v659 = vpack.c.bf16 %v597, %v593
        %v660 = vpack.c.bf16 %v647, %v644
        %v661 = vpack.c.bf16 %v605, %v601
        %v662 = vpack.c.bf16 %v607, %v603
        %v663 = vpack.c.bf16 %v655, %v652
        %v670 = vunpack.c.l.b16 %v658
        %v671 = vunpack.c.l.b16 %v659
        %v672 = vunpack.c.l.b16 %v660
        %v673 = vunpack.c.h.b16 %v658
        %v674 = vunpack.c.h.b16 %v659
        %v675 = vunpack.c.h.b16 %v660
        %v676 = vunpack.c.l.b16 %v661
        %v677 = vunpack.c.l.b16 %v662
        %v678 = vunpack.c.l.b16 %v663
        %v679 = vunpack.c.h.b16 %v661
        %v680 = vunpack.c.h.b16 %v662
        %v681 = vunpack.c.h.b16 %v663
        %v682 = vpack.c.b16 %v671, %v670
        %v683 = vpack.c.b16 %v672, %v672
        %v684 = vpack.c.b16 %v674, %v673
        %v685 = vpack.c.b16 %v675, %v675
        %v686 = vpack.c.b16 %v677, %v676
        %v687 = vpack.c.b16 %v678, %v678
        %v688 = vpack.c.b16 %v680, %v679
        %v689 = vpack.c.b16 %v681, %v681
        %698 = vst [vmem:[%s241] sm:$0xff] %v682
        %699 = vst [vmem:[%s241 + $0x8] sm:$0xf] %v683
        %700 = vst [vmem:[%s241 + $0xc] sm:$0xff] %v684
        %701 = vst [vmem:[%s241 + $0x14] sm:$0xf] %v685
        %702 = vst [vmem:[%s241 + $0x18] sm:$0xff] %v686
        %703 = vst [vmem:[%s241 + $0x20] sm:$0xf] %v687
        %704 = vst [vmem:[%s241 + $0x24] sm:$0xff] %v688
        %705 = vst [vmem:[%s241 + $0x2c] sm:$0xf] %v689
        %s706 = sand.u32 %s129, 1
        %s707 = scalar_lea.sflag [#allocation5], %s706
        %s708 = sand.u32 %s129, 1
        %s709 = smul.addr %s708, 48
        %s710 = scalar_lea.vmem [#allocation6], %s709
        // Predicated region
        $region37: #{tpu_custom_call.1} parent=31 // pred_check
          %p711 = pneg %p139
        $region38: #{tpu_custom_call.1} parent=31 // pred_check_branch
          %713 = sbr.rel (%p711) target = $region40
        $region39: #{tpu_custom_call.1} parent=31 // pred_region
          %s714 = smul.u32 4, %s26
          %s715 = smul.u32 3, %s27
          %s717 = ssub.s32 768, 768
          %718 = vsyncadd %s707, %s717
          %s719 = smul.addr %s714, 3
          %s720 = sadd.s32 %s715, %s719
          %s721 = smul.addr %s25, 12
          %s722 = sadd.s32 %s720, %s721
          %s723 = smul.addr %s722, 64
          %s724 = scalar_lea.hbm %s3, %s723
          %s725 = sshll.u32 %s710, 4
          %s726 = int_to_ptr.vmem [resolvable:$true] %s725
          %731 = dma.vmem_to_hbm [thread:$0]  %s726, 768, %s724, %s707, 192, 192, 12
        $region40: #{tpu_custom_call.1} parent=31 // pred_fallthru
          _
      $region32: #{tpu_custom_call.1} parent=5 // pred_fallthru
        _
      %p732 = scmp.le.s32.totalorder 2, %s15
      // Predicated region
      $region41: #{tpu_custom_call.1} parent=5 // pred_check
        %p733 = pneg %p732
      $region42: #{tpu_custom_call.1} parent=5 // pred_check_branch
        %735 = sbr.rel (%p733) target = $region44
      $region43: #{tpu_custom_call.1} parent=5 // pred_region
        %s736 = ssub.s32 %s15, 2
        // Predicated region
        $region45: #{tpu_custom_call.1} parent=43 // pred_check
          %p737 = pneg %p145
        $region46: #{tpu_custom_call.1} parent=43 // pred_check_branch
          %739 = sbr.rel (%p737) target = $region48
        $region47: #{tpu_custom_call.1} parent=43 // pred_region
          %s740 = sand.u32 %s130, 1
          %s741 = scalar_lea.sflag [#allocation5], %s740
          %s742 = sand.u32 %s130, 1
          %s743 = smul.addr %s742, 48
          %s744 = scalar_lea.vmem [#allocation6], %s743
          %745 = dma.done %s741, 768
        $region48: #{tpu_custom_call.1} parent=43 // pred_fallthru
          _
      $region44: #{tpu_custom_call.1} parent=5 // pred_fallthru
        _
    $region6: #{tpu_custom_call.1} parent=1 // loop_footer
      %s19 = sadd.s32 1, %s15
    $region7: #{tpu_custom_call.1} parent=1 // loop_footer_branch
      %14 = sbr.rel target = $region3
    $region8: #{tpu_custom_call.1} parent=1 // loop_exit
      _
    %746 = vsyncpa [#allocation4], 1
    %s747 = scalar_lea.sflag [#allocation4], 1
    %748 = vsyncpa %s747, 1
    %749 = vsyncpa [#allocation5], 1
    %s750 = scalar_lea.sflag [#allocation5], 1
    %751 = vsyncpa %s750, 1

</llo_original>
